<compile_context>
chip_gen: v7x
topology: tpu7x:2x2x1
jax: 0.10.0
libtpu: 0.0.40
codegen_flags: <defaults>
</compile_context>

<pallas_src>
import jax
import jax.numpy as jnp
from jax.experimental import pallas as pl
from jax.experimental.pallas import tpu as pltpu


def _stats_kernel(x_ref, sum_ref, gram_ref):
    # x_ref:    (C, Lt)  one length-tile of one batch element, channels on sublanes
    # sum_ref:  (C, 1)   running sum of x over all (N, L) positions
    # gram_ref: (C, C)   running Gram matrix  X @ X^T
    x = x_ref[...].astype(jnp.float32)

    @pl.when((pl.program_id(0) == 0) & (pl.program_id(1) == 0))
    def _():
        sum_ref[...] = jnp.zeros_like(sum_ref)
        gram_ref[...] = jnp.zeros_like(gram_ref)

    sum_ref[...] += jnp.sum(x, axis=1, keepdims=True)
    # (C, Lt) x (C, Lt) contracting on the L axis -> (C, C) on the MXU.
    gram_ref[...] += jax.lax.dot_general(
        x, x, (((1,), (1,)), ((), ())), preferred_element_type=jnp.float32)


def _apply_kernel(x_ref, w_ref, b_ref, o_ref):
    # x_ref: (C, Lt)      w_ref: (Cout, C)   b_ref: (Cout, 1)   o_ref: (Cout, Lt)
    y = jnp.dot(w_ref[...], x_ref[...], preferred_element_type=jnp.float32)
    o_ref[...] = jnp.maximum(y + b_ref[...], 0.0).astype(o_ref.dtype)


def _pick_l_tile(L):
    # Lane-dense tiles: largest multiple-of-128 divisor of L, else full L.
    for t in (2048, 1024, 512, 256, 128):
        if L % t == 0:
            return t
    return L


def encode_forward(vectors, w, b, gamma, beta):
    """JAX/Pallas equivalent of encode.forward.

    vectors: (N, ..., L) float32 ; dims 1..-2 are flattened to C (pure reshape).
    w:       (Cout, C)   -- PyTorch Linear weight layout
    b:       (Cout,)     -- Linear bias (cancels in training-mode BatchNorm)
    gamma:   (Cout,)     -- BatchNorm1d weight
    beta:    (Cout,)     -- BatchNorm1d bias
    returns: (N, Cout, L)
    """
    if vectors.ndim > 3:
        vectors = vectors.reshape(vectors.shape[0], -1, vectors.shape[-1])
    x3 = vectors.astype(jnp.float32)          # (N, C, L) -- no transpose needed
    N, C, L = x3.shape
    Cout = w.shape[0]

    Lt = _pick_l_tile(L)
    T = L // Lt
    M = N * L

    # ---- Pass 1: global first/second moments of x (exact BN stats under tiling).
    sum_x, gram = pl.pallas_call(
        _stats_kernel,
        out_shape=(jax.ShapeDtypeStruct((C, 1), jnp.float32),
                   jax.ShapeDtypeStruct((C, C), jnp.float32)),
        grid=(N, T),
        in_specs=[pl.BlockSpec((None, C, Lt), lambda n, t: (n, 0, t))],
        out_specs=(pl.BlockSpec((C, 1), lambda n, t: (0, 0)),
                   pl.BlockSpec((C, C), lambda n, t: (0, 0))),
        compiler_params=pltpu.CompilerParams(
            dimension_semantics=("arbitrary", "arbitrary")),
    )(x3)

    # ---- Tiny host-side glue: derive mean/var of y = W x + b, fold BN into W.
    w32 = w.astype(jnp.float32)
    mean_x = sum_x[:, 0] / M                                   # (C,)
    cov_x = gram / M - jnp.outer(mean_x, mean_x)               # (C, C)
    var_y = jnp.einsum("oi,ij,oj->o", w32, cov_x, w32)         # (Cout,)  Var(Wx+b)
    mean_wx = w32 @ mean_x                                     # (Cout,)  Linear bias cancels
    scale = gamma.astype(jnp.float32) / jnp.sqrt(var_y + 1e-5)
    w_eff = scale[:, None] * w32                               # (Cout, C)
    b_eff = (beta.astype(jnp.float32) - scale * mean_wx).reshape(Cout, 1)

    # ---- Pass 2: o = relu(W_eff @ x + b_eff), written directly in (N, Cout, L).
    out = pl.pallas_call(
        _apply_kernel,
        out_shape=jax.ShapeDtypeStruct((N, Cout, L), jnp.float32),
        grid=(N, T),
        in_specs=[pl.BlockSpec((None, C, Lt), lambda n, t: (n, 0, t)),
                  pl.BlockSpec((Cout, C), lambda n, t: (0, 0)),
                  pl.BlockSpec((Cout, 1), lambda n, t: (0, 0))],
        out_specs=pl.BlockSpec((None, Cout, Lt), lambda n, t: (n, 0, t)),
        compiler_params=pltpu.CompilerParams(
            dimension_semantics=("parallel", "parallel")),
    )(x3, w_eff, b_eff)
    return out


def _reference(vectors, w, b, gamma, beta):
    """Pure-JAX reference mirroring the PyTorch forward (training-mode BN)."""
    if vectors.ndim > 3:
        vectors = vectors.reshape(vectors.shape[0], -1, vectors.shape[-1])
    x = jnp.transpose(vectors, (0, 2, 1))                 # (N, L, C)
    y = jnp.einsum("nlc,oc->nlo", x, w) + b               # (N, L, Cout)
    y = jnp.transpose(y, (0, 2, 1))                       # (N, Cout, L)
    mean = jnp.mean(y, axis=(0, 2), keepdims=True)
    var = jnp.mean((y - mean) ** 2, axis=(0, 2), keepdims=True)
    y = (y - mean) / jnp.sqrt(var + 1e-5)
    y = y * gamma.reshape(1, -1, 1) + beta.reshape(1, -1, 1)
    return jnp.maximum(y, 0.0)


if __name__ == "__main__":
    key = jax.random.PRNGKey(0)
    k_x, k_w, k_b, k_g, k_bt = jax.random.split(key, 5)

    # Small shapes consistent with the module:
    #   vectors (N=2, A=2, B=2, L=16) -> flatten -> (2, C=4, 16)
    N, A, B, L = 2, 2, 2, 16
    in_channel = A * B          # 4
    out_channel = 32

    vectors = jax.random.normal(k_x, (N, A, B, L), dtype=jnp.float32)

    bound = 1.0 / (in_channel ** 0.5)
    w = jax.random.uniform(k_w, (out_channel, in_channel),
                           minval=-bound, maxval=bound, dtype=jnp.float32)
    b = jax.random.uniform(k_b, (out_channel,),
                           minval=-bound, maxval=bound, dtype=jnp.float32)
    gamma = 1.0 + 0.1 * jax.random.normal(k_g, (out_channel,), dtype=jnp.float32)
    beta = 0.1 * jax.random.normal(k_bt, (out_channel,), dtype=jnp.float32)

    out = jax.block_until_ready(encode_forward(vectors, w, b, gamma, beta))
    ref = jax.block_until_ready(_reference(vectors, w, b, gamma, beta))

    assert out.shape == (N, out_channel, L), out.shape
    assert jnp.allclose(out, ref, atol=1e-4, rtol=1e-4), float(
        jnp.max(jnp.abs(out - ref)))

    print("KERNEL_OK")
</pallas_src>

<mosaic_0001>
module attributes {stable_mosaic.version = 11 : i64} {
  func.func @_stats_kernel(%arg0: i32, %arg1: i32, %arg2: memref<1x4x16xf32, #tpu.memory_space<vmem>>, %arg3: memref<4x1xf32, #tpu.memory_space<vmem>>, %arg4: memref<4x4xf32, #tpu.memory_space<vmem>>) attributes {dimension_semantics = [#tpu.dimension_semantics<arbitrary>, #tpu.dimension_semantics<arbitrary>], iteration_bounds = array<i64: 2, 1>, scalar_prefetch = 0 : i64, scratch_operands = 0 : i64, tpu.core_type = #tpu.core_type<tc>, window_params = [{transform_indices = @transform_0, window_bounds = array<i64: 1, 4, 16>}, {pipeline_mode = #tpu.pipeline_mode<synchronous>, transform_indices = @transform_1, window_bounds = array<i64: 4, 1>}, {pipeline_mode = #tpu.pipeline_mode<synchronous>, transform_indices = @transform_2, window_bounds = array<i64: 4, 4>}]} {
    %c0 = arith.constant 0 : index
    %c0_0 = arith.constant 0 : index
    %c0_1 = arith.constant 0 : index
    %0 = vector.load %arg2[%c0, %c0_0, %c0_1] : memref<1x4x16xf32, #tpu.memory_space<vmem>>, vector<1x4x16xf32>
    %1 = vector.shape_cast %0 : vector<1x4x16xf32> to vector<4x16xf32>
    %c0_i32 = arith.constant 0 : i32
    %2 = arith.cmpi eq, %arg0, %c0_i32 : i32
    %c0_i32_2 = arith.constant 0 : i32
    %3 = arith.cmpi eq, %arg1, %c0_i32_2 : i32
    %4 = arith.andi %2, %3 : i1
    %5 = arith.extui %4 : i1 to i32
    %c0_i32_3 = arith.constant 0 : i32
    %6 = arith.cmpi ne, %5, %c0_i32_3 : i32
    scf.if %6 {
      %cst_13 = arith.constant 0.000000e+00 : f32
      %16 = vector.broadcast %cst_13 : f32 to vector<4x1xf32>
      %c0_14 = arith.constant 0 : index
      %c0_15 = arith.constant 0 : index
      %17 = vector.load %arg3[%c0_14, %c0_15] : memref<4x1xf32, #tpu.memory_space<vmem>>, vector<4x1xf32>
      tpu.vector_store %arg3[%c0_14, %c0_15], %16 {strides = array<i32>} : memref<4x1xf32, #tpu.memory_space<vmem>>, vector<4x1xf32>,
      %cst_16 = arith.constant 0.000000e+00 : f32
      %18 = vector.broadcast %cst_16 : f32 to vector<4x4xf32>
      %c0_17 = arith.constant 0 : index
      %c0_18 = arith.constant 0 : index
      %19 = vector.load %arg4[%c0_17, %c0_18] : memref<4x4xf32, #tpu.memory_space<vmem>>, vector<4x4xf32>
      tpu.vector_store %arg4[%c0_17, %c0_18], %18 {strides = array<i32>} : memref<4x4xf32, #tpu.memory_space<vmem>>, vector<4x4xf32>,
    } else {
    }
    %c0_4 = arith.constant 0 : index
    %c0_5 = arith.constant 0 : index
    %7 = vector.load %arg3[%c0_4, %c0_5] : memref<4x1xf32, #tpu.memory_space<vmem>>, vector<4x1xf32>
    %cst = arith.constant dense<0.000000e+00> : vector<4xf32>
    %8 = vector.multi_reduction <add>, %1, %cst [1] : vector<4x16xf32> to vector<4xf32>
    %9 = vector.shape_cast %8 : vector<4xf32> to vector<4x1xf32>
    %10 = arith.addf %7, %9 : vector<4x1xf32>
    %c0_6 = arith.constant 0 : index
    %c0_7 = arith.constant 0 : index
    %11 = vector.load %arg3[%c0_6, %c0_7] : memref<4x1xf32, #tpu.memory_space<vmem>>, vector<4x1xf32>
    tpu.vector_store %arg3[%c0_6, %c0_7], %10 {strides = array<i32>} : memref<4x1xf32, #tpu.memory_space<vmem>>, vector<4x1xf32>,
    %c0_8 = arith.constant 0 : index
    %c0_9 = arith.constant 0 : index
    %12 = vector.load %arg4[%c0_8, %c0_9] : memref<4x4xf32, #tpu.memory_space<vmem>>, vector<4x4xf32>
    %cst_10 = arith.constant dense<0.000000e+00> : vector<4x4xf32>
    %13 = tpu.matmul %1, %1, %cst_10 {dimension_numbers = #tpu.dot_dimension_numbers<[1], [1], [0], [0], [0, 0, 1, 0], [], []>} : vector<4x16xf32>, vector<4x16xf32>, vector<4x4xf32> -> vector<4x4xf32>
    %14 = arith.addf %12, %13 : vector<4x4xf32>
    %c0_11 = arith.constant 0 : index
    %c0_12 = arith.constant 0 : index
    %15 = vector.load %arg4[%c0_11, %c0_12] : memref<4x4xf32, #tpu.memory_space<vmem>>, vector<4x4xf32>
    tpu.vector_store %arg4[%c0_11, %c0_12], %14 {strides = array<i32>} : memref<4x4xf32, #tpu.memory_space<vmem>>, vector<4x4xf32>,
    return
  }
  func.func @transform_0(%arg0: i32, %arg1: i32) -> (i32, i32, i32) {
    %c0_i32 = arith.constant 0 : i32
    %c0_i32_0 = arith.constant 0 : i32
    return %arg0, %c0_i32, %arg1 : i32, i32, i32
  }
  func.func @transform_1(%arg0: i32, %arg1: i32) -> (i32, i32) {
    %c0_i32 = arith.constant 0 : i32
    %c0_i32_0 = arith.constant 0 : i32
    %c0_i32_1 = arith.constant 0 : i32
    return %c0_i32, %c0_i32_0 : i32, i32
  }
  func.func @transform_2(%arg0: i32, %arg1: i32) -> (i32, i32) {
    %c0_i32 = arith.constant 0 : i32
    %c0_i32_0 = arith.constant 0 : i32
    %c0_i32_1 = arith.constant 0 : i32
    return %c0_i32, %c0_i32_0 : i32, i32
  }
}

</mosaic_0001>

<llo_original>
// kernel: tpu_custom_call.1
$region0: #{tpu_custom_call.1}
  #allocation0 [shape = 'u32[]', space=smem, size = 0x4, offset = 0x4, fixed_abs, tag = 'smem constant byte address 0x4 - core index']
  #allocation1 [shape = 'u32[144,128]{1,0:T(1,128)}', space=vmem, size = 0x12000, scoped, tag = 'internal scratch']
  %s0 = inlined_call_operand.hbm [shape: f32[2,4,16], index: 0, kind: input, shape index: {}]
  %s1 = inlined_call_operand.vmem [shape: f32[4,1], index: 1, kind: output, shape index: {0}]
  %s2 = inlined_call_operand.hbm [shape: f32[4,4], index: 2, kind: output, shape index: {1}]
  %3 = xla_tuple %s1, %s2
  %s4 = sld [smem:[#allocation0]]
  $region53: #{tpu_custom_call.1} parent=0
    _
  %s6 = ssub.s32 1, %s4
  %s7 = scalar_select 0, %s6, %s4
  $region1: #{tpu_custom_call.1} parent=0
    #allocation2 [shape = 'u8[4096]{0}', space=vmem, size = 0x1000, scoped, tag = 'input window, operand 0']
    #allocation3 [shape = 's32[2]{0}', space=sflag, size = 0x8, scoped, tag = 'scoped memory for tpu_custom_call.1']
    #allocation4 [shape = 's32[2]{0}', space=sflag, size = 0x8, scoped, tag = 'scoped memory for tpu_custom_call.1']
    #allocation5 [shape = 'u8[2048]{0}', space=vmem, size = 0x800, scoped, tag = 'output window, operand 1, single buffered']
    %8 = vsyncpa [#allocation3], 0
    %s9 = scalar_lea.sflag [#allocation3], 1
    %10 = vsyncpa %s9, 0
    %11 = vsyncpa [#allocation4], 0
    loop: start=0, step=1, limit=4
    $region2: #{tpu_custom_call.1} parent=1 // loop_pre_header
      _
    $region3: #{tpu_custom_call.1} parent=1 // loop_header
      %s13 = sphi 0, %s17
      %p14 = scmp.ge.s32.totalorder %s13, 4
      %s20 = sphi 0, %s32
      %s21 = sphi 0, %s28
      %s22 = sphi 0, %s20
      %s23 = sphi 0, %s21
      %s24 = sphi 0, %s22
      %s25 = sphi 0, %s23
      %s37 = sphi 0, %s39
      %s40 = sphi 0, %s37
      %s41 = sphi 0, %s40
      %s57 = sphi 0, %s41
      %s61 = sphi 0, %s61
      %s63 = sphi 0, %s61
      %s64 = sphi 0, %s63
      %s78 = sphi 0, %s64
      %s82 = sphi 0, %s82
      %s84 = sphi 0, %s82
      %s85 = sphi 0, %s84
      %s99 = sphi 0, %s85
    $region4: #{tpu_custom_call.1} parent=1 // loop_header_branch
      %16 = sbr.rel (%p14) target = $region8
    $region5: #{tpu_custom_call.1} parent=1 // loop_body
      %s18 = ssub.s32 %s13, 1
      %s19 = ssub.s32 %s13, 2
      %s26 = sadd.s32 1, %s21
      %p27 = scmp.ge.s32.totalorder %s26, 1
      %s28 = scalar_select %p27, 0, %s26
      %s29 = sadd.s32 1, %s20
      %s30 = scalar_select %p27, %s29, %s20
      %p31 = scmp.ge.s32.totalorder %s30, 2
      %s32 = scalar_select %p31, 0, %s30
      %s33 = ssub.s32 %s20, %s32
      %s34 = ssub.s32 %s21, %s28
      %s35 = sor.u32 %s33, %s34
      %p36 = scmp.eq.s32.totalorder %s35, 0
      %s38 = sadd.s32 %s37, 1
      %s39 = scalar_select %p36, %s37, %s38
      %p42 = pneg %p36
      %p43 = scmp.eq.s32.totalorder %s13, 1
      %p44 = por %p42, %p43
      %p45 = scmp.ne.s32.totalorder %s37, %s40
      %p46 = scmp.eq.s32.totalorder %s13, 0
      %p47 = por %p45, %p46
      %p48 = scmp.ne.s32.totalorder %s37, %s40
      %p49 = scmp.eq.s32.totalorder %s18, 1
      %p50 = por %p48, %p49
      %p51 = scmp.ne.s32.totalorder %s40, %s41
      %p52 = scmp.eq.s32.totalorder %s18, 0
      %p53 = por %p51, %p52
      %p54 = scmp.ne.s32.totalorder %s40, %s41
      %p55 = scmp.eq.s32.totalorder %s19, 1
      %p56 = por %p54, %p55
      %p58 = scmp.ne.s32.totalorder %s41, %s57
      %p59 = scmp.eq.s32.totalorder %s19, 0
      %p60 = por %p58, %p59
      %s62 = sadd.s32 %s61, 1
      %p65 = scmp.eq.s32.totalorder %s13, 1
      %p66 = scmp.ne.s32.totalorder %s61, %s63
      %p67 = scmp.eq.s32.totalorder %s13, 0
      %p68 = por %p66, %p67
      %p69 = scmp.ne.s32.totalorder %s61, %s63
      %p70 = scmp.eq.s32.totalorder %s18, 1
      %p71 = por %p69, %p70
      %p72 = scmp.ne.s32.totalorder %s63, %s64
      %p73 = scmp.eq.s32.totalorder %s18, 0
      %p74 = por %p72, %p73
      %p75 = scmp.ne.s32.totalorder %s63, %s64
      %p76 = scmp.eq.s32.totalorder %s19, 1
      %p77 = por %p75, %p76
      %p79 = scmp.ne.s32.totalorder %s64, %s78
      %p80 = scmp.eq.s32.totalorder %s19, 0
      %p81 = por %p79, %p80
      %s83 = sadd.s32 %s82, 1
      %p86 = scmp.eq.s32.totalorder %s13, 1
      %p87 = scmp.ne.s32.totalorder %s82, %s84
      %p88 = scmp.eq.s32.totalorder %s13, 0
      %p89 = por %p87, %p88
      %p90 = scmp.ne.s32.totalorder %s82, %s84
      %p91 = scmp.eq.s32.totalorder %s18, 1
      %p92 = por %p90, %p91
      %p93 = scmp.ne.s32.totalorder %s84, %s85
      %p94 = scmp.eq.s32.totalorder %s18, 0
      %p95 = por %p93, %p94
      %p96 = scmp.ne.s32.totalorder %s84, %s85
      %p97 = scmp.eq.s32.totalorder %s19, 1
      %p98 = por %p96, %p97
      %p100 = scmp.ne.s32.totalorder %s85, %s99
      %p101 = scmp.eq.s32.totalorder %s19, 0
      %p102 = por %p100, %p101
      %p103 = scmp.le.s32.totalorder 1, %s13
      %p104 = scmp.lt.s32.totalorder %s13, 3
      %p105 = pnand %p103, %p104
      %p106 = pneg %p105
      // Predicated region
      $region9: #{tpu_custom_call.1} parent=5 // pred_check
        _
      $region10: #{tpu_custom_call.1} parent=5 // pred_check_branch
        %108 = sbr.rel (%p105) target = $region12
      $region11: #{tpu_custom_call.1} parent=5 // pred_region
        %s109 = ssub.s32 %s13, 1
      $region12: #{tpu_custom_call.1} parent=5 // pred_fallthru
        _
      %p110 = scmp.lt.s32.totalorder %s13, 2
      // Predicated region
      $region13: #{tpu_custom_call.1} parent=5 // pred_check
        %p111 = pneg %p110
      $region14: #{tpu_custom_call.1} parent=5 // pred_check_branch
        %113 = sbr.rel (%p111) target = $region16
      $region15: #{tpu_custom_call.1} parent=5 // pred_region
        // Predicated region
        $region17: #{tpu_custom_call.1} parent=15 // pred_check
          %p114 = pneg %p47
        $region18: #{tpu_custom_call.1} parent=15 // pred_check_branch
          %116 = sbr.rel (%p114) target = $region20
        $region19: #{tpu_custom_call.1} parent=15 // pred_region
          %s117 = sand.u32 %s37, 1
          %s118 = scalar_lea.sflag [#allocation3], %s117
          %s119 = sand.u32 %s37, 1
          %s120 = smul.addr %s119, 4
          %s121 = scalar_lea.vmem [#allocation2], %s120
          %s123 = ssub.s32 64, 64
          %124 = vsyncadd %s118, %s123
          %s125 = sadd.s32 %s21, %s20
          %s126 = smul.addr %s125, 64
          %s127 = scalar_lea.hbm %s0, %s126
          %s129 = sshll.u32 %s121, 4
          %s130 = int_to_ptr.vmem [resolvable:$true] %s129
          %132 = dma.hbm_to_vmem [thread:$0]  %s127, 64, %s130, %s118
        $region20: #{tpu_custom_call.1} parent=15 // pred_fallthru
          _
      $region16: #{tpu_custom_call.1} parent=5 // pred_fallthru
        _
      %p133 = scmp.le.s32.totalorder 1, %s13
      %p134 = scmp.lt.s32.totalorder %s13, 3
      %p135 = pnand %p133, %p134
      %p136 = pneg %p135
      // Predicated region
      $region21: #{tpu_custom_call.1} parent=5 // pred_check
        _
      $region22: #{tpu_custom_call.1} parent=5 // pred_check_branch
        %138 = sbr.rel (%p135) target = $region24
      $region23: #{tpu_custom_call.1} parent=5 // pred_region
        %s139 = ssub.s32 %s13, 1
        %s140 = sand.u32 %s40, 1
        %s141 = scalar_lea.sflag [#allocation3], %s140
        %s142 = sand.u32 %s40, 1
        %s143 = smul.addr %s142, 4
        %s144 = scalar_lea.vmem [#allocation2], %s143
        // Predicated region
        $region25: #{tpu_custom_call.1} parent=23 // pred_check
          %p145 = pneg %p53
        $region26: #{tpu_custom_call.1} parent=23 // pred_check_branch
          %147 = sbr.rel (%p145) target = $region28
        $region27: #{tpu_custom_call.1} parent=23 // pred_region
          %148 = dma.done %s141, 64
        $region28: #{tpu_custom_call.1} parent=23 // pred_fallthru
          _
        %s149 = sand.u32 %s40, 1
        %s150 = scalar_lea.sflag [#allocation3], %s149
        %s151 = sand.u32 %s40, 1
        %s152 = smul.addr %s151, 4
        %s153 = scalar_lea.vmem [#allocation2], %s152
        %p154 = pneg %p53
        %p155 = pneg %p50
        %p156 = pneg %p74
        %p157 = pneg %p71
        %p158 = pneg %p95
        %p159 = pneg %p92
        %v160 = vld [vmem:[%s144] sm:$0xf]
        %p161 = scmp.eq.s32.totalorder %s22, 0
        %p162 = scmp.eq.s32.totalorder %s23, 0
        %p163 = pnand %p161, %p162
        %p164 = pneg %p163
        // Predicated region
        $region29: #{tpu_custom_call.1} parent=23 // pred_check
          _
        $region30: #{tpu_custom_call.1} parent=23 // pred_check_branch
          %166 = sbr.rel (%p163) target = $region32
        $region31: #{tpu_custom_call.1} parent=23 // pred_region
          %vm167 = vcmask 3072
          %168 = vst.msk [vmem:[%s1] sm:$0xf] %vm167, 0.0
          %vm169 = vcmask 27648
          %170 = vst.msk [vmem:[#allocation5] sm:$0xf] %vm169, 0.0
        $region32: #{tpu_custom_call.1} parent=23 // pred_fallthru
          _
        %v171 = vld [vmem:[%s1] sm:$0xf]
        %vm172 = vcmask 125952
        %v173 = vsel %vm172, %v160, 0.0
        %174 = vadd.xlane.f32.xlu0 %v173
        %v175 = vpop.xlane.xlu0 %174
        %v176 = vadd.f32 %v171, %v175
        %vm177 = vcmask 3072
        %178 = vst.msk [vmem:[%s1] sm:$0xf] %vm177, %v176
        %v179 = vld [vmem:[#allocation5] sm:$0xf]
        %vm180 = vcmask 130048
        %v182 = vsel %vm180, %v160, 0
        %184 = vmatprep.subr.mxu0 0.0
        %185 = vmatpush1.xpose.msra.mxu0 %v182
        %186 = vmatprep.subr.mxu0 0.0
        %187 = vmatpush1.xpose.msra.mxu0 0.0
        %188 = vmatprep.subr.mxu0 0.0
        %189 = vmatpush1.xpose.msra.mxu0 0.0
        %190 = vmatprep.subr.mxu0 0.0
        %191 = vmatpush1.xpose.msra.mxu0 0.0
        %192 = vmatprep.subr.mxu0 0.0
        %193 = vmatpush1.xpose.msra.mxu0 0.0
        %194 = vmatprep.subr.mxu0 0.0
        %195 = vmatpush1.xpose.msra.mxu0 0.0
        %196 = vmatprep.subr.mxu0 0.0
        %197 = vmatpush1.xpose.msra.mxu0 0.0
        %198 = vmatprep.subr.mxu0 0.0
        %199 = vmatpush1.xpose.msra.mxu0 0.0
        %200 = vmatprep.subr.mxu0 0.0
        %201 = vmatpush1.xpose.msra.mxu0 0.0
        %202 = vmatprep.subr.mxu0 0.0
        %203 = vmatpush1.xpose.msra.mxu0 0.0
        %204 = vmatprep.subr.mxu0 0.0
        %205 = vmatpush1.xpose.msra.mxu0 0.0
        %206 = vmatprep.subr.mxu0 0.0
        %207 = vmatpush1.xpose.msra.mxu0 0.0
        %208 = vmatprep.subr.mxu0 0.0
        %209 = vmatpush1.xpose.msra.mxu0 0.0
        %210 = vmatprep.subr.mxu0 0.0
        %211 = vmatpush1.xpose.msra.mxu0 0.0
        %212 = vmatprep.subr.mxu0 0.0
        %213 = vmatpush1.xpose.msra.mxu0 0.0
        %214 = vmatprep.subr.mxu0 0.0
        %215 = vmatpush1.xpose.msra.mxu0 0.0
        %216 = vmatprep.subr.mxu0 0.0
        %217 = vmatpush1.xpose.msra.mxu0 0.0
        %218 = vmatprep.subr.mxu0 0.0
        %219 = vmatpush1.xpose.msra.mxu0 0.0
        %220 = vmatprep.subr.mxu0 0.0
        %221 = vmatpush1.xpose.msra.mxu0 0.0
        %222 = vmatprep.subr.mxu0 0.0
        %223 = vmatpush1.xpose.msra.mxu0 0.0
        %224 = vmatprep.subr.mxu0 0.0
        %225 = vmatpush1.xpose.msra.mxu0 0.0
        %226 = vmatprep.subr.mxu0 0.0
        %227 = vmatpush1.xpose.msra.mxu0 0.0
        %228 = vmatprep.subr.mxu0 0.0
        %229 = vmatpush1.xpose.msra.mxu0 0.0
        %230 = vmatprep.subr.mxu0 0.0
        %231 = vmatpush1.xpose.msra.mxu0 0.0
        %232 = vmatprep.subr.mxu0 0.0
        %233 = vmatpush1.xpose.msra.mxu0 0.0
        %234 = vmatprep.subr.mxu0 0.0
        %235 = vmatpush1.xpose.msra.mxu0 0.0
        %236 = vmatprep.subr.mxu0 0.0
        %237 = vmatpush1.xpose.msra.mxu0 0.0
        %238 = vmatprep.subr.mxu0 0.0
        %239 = vmatpush1.xpose.msra.mxu0 0.0
        %240 = vmatprep.subr.mxu0 0.0
        %241 = vmatpush1.xpose.msra.mxu0 0.0
        %242 = vmatprep.subr.mxu0 0.0
        %243 = vmatpush1.xpose.msra.mxu0 0.0
        %244 = vmatprep.subr.mxu0 0.0
        %245 = vmatpush1.xpose.msra.mxu0 0.0
        %246 = vmatprep.subr.mxu0 0.0
        %247 = vmatpush1.xpose.msra.mxu0 0.0
        %248 = vmatprep.mubr.f32.mxu0 0.0
        %249 = vmatmul.mubr.f32.gmra.mrb[0].mxu0 %v182
        %v250 = vpop.f32.mrb[0].mxu0
        %v251 = vadd.f32 0.0, %v250
        %v252 = vpop.f32.mrb[0].mxu0
        %253 = vdwg.mxu0
        %v254 = vadd.f32 %v179, %v251
        %vm255 = vcmask 27648
        %256 = vst.msk [vmem:[#allocation5] sm:$0xf] %vm255, %v254
        // Predicated region
        $region33: #{tpu_custom_call.1} parent=23 // pred_check
          %p257 = pneg %p71
        $region34: #{tpu_custom_call.1} parent=23 // pred_check_branch
          %259 = sbr.rel (%p257) target = $region36
        $region35: #{tpu_custom_call.1} parent=23 // pred_region
          _
        $region36: #{tpu_custom_call.1} parent=23 // pred_fallthru
          _
        // Predicated region
        $region37: #{tpu_custom_call.1} parent=23 // pred_check
          %p260 = pneg %p92
        $region38: #{tpu_custom_call.1} parent=23 // pred_check_branch
          %262 = sbr.rel (%p260) target = $region40
        $region39: #{tpu_custom_call.1} parent=23 // pred_region
          %s264 = ssub.s32 64, 64
          %265 = vsyncadd [#allocation4], %s264
          %s267 = sshll.u32 [#allocation5], 4
          %s268 = int_to_ptr.vmem [resolvable:$true] %s267
          %270 = dma.vmem_to_hbm [thread:$0]  %s268, 64, %s2, [#allocation4]
        $region40: #{tpu_custom_call.1} parent=23 // pred_fallthru
          _
        // Predicated region
        $region41: #{tpu_custom_call.1} parent=23 // pred_check
          %p271 = pneg %p71
        $region42: #{tpu_custom_call.1} parent=23 // pred_check_branch
          %273 = sbr.rel (%p271) target = $region44
        $region43: #{tpu_custom_call.1} parent=23 // pred_region
          _
        $region44: #{tpu_custom_call.1} parent=23 // pred_fallthru
          _
        // Predicated region
        $region45: #{tpu_custom_call.1} parent=23 // pred_check
          %p274 = pneg %p92
        $region46: #{tpu_custom_call.1} parent=23 // pred_check_branch
          %276 = sbr.rel (%p274) target = $region48
        $region47: #{tpu_custom_call.1} parent=23 // pred_region
          %277 = dma.done [#allocation4], 64
        $region48: #{tpu_custom_call.1} parent=23 // pred_fallthru
          _
      $region24: #{tpu_custom_call.1} parent=5 // pred_fallthru
        _
      %p278 = scmp.le.s32.totalorder 2, %s13
      // Predicated region
      $region49: #{tpu_custom_call.1} parent=5 // pred_check
        %p279 = pneg %p278
      $region50: #{tpu_custom_call.1} parent=5 // pred_check_branch
        %281 = sbr.rel (%p279) target = $region52
      $region51: #{tpu_custom_call.1} parent=5 // pred_region
        %s282 = ssub.s32 %s13, 2
      $region52: #{tpu_custom_call.1} parent=5 // pred_fallthru
        _
    $region6: #{tpu_custom_call.1} parent=1 // loop_footer
      %s17 = sadd.s32 1, %s13
    $region7: #{tpu_custom_call.1} parent=1 // loop_footer_branch
      %12 = sbr.rel target = $region3
    $region8: #{tpu_custom_call.1} parent=1 // loop_exit
      _
    %283 = vsyncpa [#allocation3], 1
    %s284 = scalar_lea.sflag [#allocation3], 1
    %285 = vsyncpa %s284, 1
    %286 = vsyncpa [#allocation4], 1
    %s287 = scalar_lea.sflag [#allocation4], 1
    %288 = vsyncpa %s287, 1

</llo_original>
